<compile_context>
chip_gen: v7x
topology: tpu7x:2x2x1
jax: 0.10.0
libtpu: 0.0.40
codegen_flags: <defaults>
</compile_context>

<pallas_src>
import functools
import math

import jax
import jax.numpy as jnp
from jax.experimental import pallas as pl
from jax.experimental.pallas import tpu as pltpu


def _round_up(x, m):
    return ((x + m - 1) // m) * m


def _vmem_limit_bytes(block_elems, itemsize=4):
    # 2x for double buffering + headroom; clamp to [32 MiB, 64 MiB] (v7x physical = 64 MiB).
    need = 2 * itemsize * block_elems + (8 << 20)
    return int(min(64 << 20, max(need, 32 << 20)))


# ---------------------------------------------------------------------------
# Dense projection kernel: y = x @ W_t + b   (W_t = nn.Linear weight, pre-transposed)
# ---------------------------------------------------------------------------
def _dense_kernel(x_ref, w_ref, b_ref, o_ref):
    # Keep matmul operands in their native dtype; accumulate in f32 on the MXU.
    y = jnp.dot(x_ref[...], w_ref[...], preferred_element_type=jnp.float32)
    y = y + b_ref[...].astype(jnp.float32)
    o_ref[...] = y.astype(o_ref.dtype)


def _dense(x2, w_t, b, *, tm=256):
    M, K = x2.shape
    O = w_t.shape[1]
    # Big row tiles (per-grid-step overhead ~0.35us); shrink only when rows are few.
    tm_eff = min(tm, _round_up(M, 8))
    Mp = _round_up(M, tm_eff)
    xp = x2 if Mp == M else jnp.pad(x2, ((0, Mp - M), (0, 0)))
    b2 = b.reshape(1, O)

    block_elems = tm_eff * K + K * O + O + tm_eff * O
    out = pl.pallas_call(
        _dense_kernel,
        out_shape=jax.ShapeDtypeStruct((Mp, O), x2.dtype),
        grid_spec=pltpu.PrefetchScalarGridSpec(
            num_scalar_prefetch=0,
            grid=(Mp // tm_eff,),
            in_specs=[
                pl.BlockSpec((tm_eff, K), lambda i: (i, 0)),   # activation row tile
                pl.BlockSpec((K, O), lambda i: (0, 0)),        # weight (resident)
                pl.BlockSpec((1, O), lambda i: (0, 0)),        # bias
            ],
            out_specs=pl.BlockSpec((tm_eff, O), lambda i: (i, 0)),
        ),
        compiler_params=pltpu.CompilerParams(
            dimension_semantics=("parallel",),
            vmem_limit_bytes=_vmem_limit_bytes(block_elems, xp.dtype.itemsize),
        ),
    )(xp, w_t, b2)
    return out[:M] if Mp != M else out


# ---------------------------------------------------------------------------
# Per-(batch*head) attention kernel: scores -> softmax -> context
# ---------------------------------------------------------------------------
def _attn_kernel(q_ref, k_ref, v_ref, p_ref, c_ref, *, scale):
    q = q_ref[0]          # (Sa, d), native dtype
    k = k_ref[0]          # (Sb, d)
    v = v_ref[0]          # (Sb, d)

    # scores = q @ k^T * (1/sqrt(d)), f32 accumulation on the MXU
    s = jax.lax.dot_general(q, k, (((1,), (1,)), ((), ())),
                            preferred_element_type=jnp.float32) * scale

    # numerically-stable softmax over keys
    m = jnp.max(s, axis=-1, keepdims=True)
    e = jnp.exp(s - m)
    p = e / jnp.sum(e, axis=-1, keepdims=True)
    p_ref[0] = p.astype(p_ref.dtype)

    # TODO(synk): training-mode dropout on attention probs (pltpu.prng_random_bits
    #             mask) not implemented; eval/inference behaviour (identity) is used.
    ctx = jnp.dot(p.astype(v.dtype), v, preferred_element_type=jnp.float32)
    c_ref[0] = ctx.astype(c_ref.dtype)


def _attention(qh, kh, vh, *, scale):
    BH, Sa, d = qh.shape
    Sb = kh.shape[1]
    block_elems = Sa * d + 2 * Sb * d + Sa * Sb + Sa * d
    probs, ctx = pl.pallas_call(
        functools.partial(_attn_kernel, scale=scale),
        out_shape=(
            jax.ShapeDtypeStruct((BH, Sa, Sb), qh.dtype),
            jax.ShapeDtypeStruct((BH, Sa, d), qh.dtype),
        ),
        grid_spec=pltpu.PrefetchScalarGridSpec(
            num_scalar_prefetch=0,
            grid=(BH,),
            in_specs=[
                pl.BlockSpec((1, Sa, d), lambda i: (i, 0, 0)),
                pl.BlockSpec((1, Sb, d), lambda i: (i, 0, 0)),
                pl.BlockSpec((1, Sb, d), lambda i: (i, 0, 0)),
            ],
            out_specs=(
                pl.BlockSpec((1, Sa, Sb), lambda i: (i, 0, 0)),
                pl.BlockSpec((1, Sa, d), lambda i: (i, 0, 0)),
            ),
        ),
        compiler_params=pltpu.CompilerParams(
            dimension_semantics=("parallel",),
            vmem_limit_bytes=_vmem_limit_bytes(block_elems, 4),
        ),
    )(qh, kh, vh)
    return probs, ctx


# ---------------------------------------------------------------------------
# CrossAttention forward (eval mode)
# ---------------------------------------------------------------------------
def cross_attention(drugA, drugB, params, num_attention_heads, *, tm=256):
    """drugA: (B, Sa, H) -> queries; drugB: (B, Sb, H) -> keys/values.
    params: dict with 'wq','bq','wk','bk','wv','bv'; w* are nn.Linear weights (H, H).
    Returns (context_layer (B, Sa, H), attention_probs (B, nH, Sa, Sb))."""
    B, Sa, H = drugA.shape
    Sb = drugB.shape[1]
    nH = num_attention_heads
    assert H % nH == 0, "hidden size must be a multiple of num heads"
    d = H // nH

    # Q projection over drugA; fused K|V projection over drugB (one resident weight).
    q2 = _dense(drugA.reshape(B * Sa, H), params["wq"].T, params["bq"], tm=tm)
    w_kv = jnp.concatenate([params["wk"], params["wv"]], axis=0)        # (2H, H)
    b_kv = jnp.concatenate([params["bk"], params["bv"]], axis=0)        # (2H,)
    kv2 = _dense(drugB.reshape(B * Sb, H), w_kv.T, b_kv, tm=tm)         # (B*Sb, 2H)
    k2, v2 = kv2[:, :H], kv2[:, H:]

    # Head split (wrapper-side layout plumbing; keeps the lane axis dense per head).
    def split_heads(x2, S):
        return x2.reshape(B, S, nH, d).transpose(0, 2, 1, 3).reshape(B * nH, S, d)

    qh, kh, vh = split_heads(q2, Sa), split_heads(k2, Sb), split_heads(v2, Sb)

    probs, ctx = _attention(qh, kh, vh, scale=1.0 / math.sqrt(d))

    context = ctx.reshape(B, nH, Sa, d).transpose(0, 2, 1, 3).reshape(B, Sa, H)
    attention_probs = probs.reshape(B, nH, Sa, Sb)
    return context, attention_probs


# ---------------------------------------------------------------------------
# Pure-JAX reference
# ---------------------------------------------------------------------------
def _reference(drugA, drugB, params, num_heads):
    B, Sa, H = drugA.shape
    Sb = drugB.shape[1]
    d = H // num_heads
    q = drugA @ params["wq"].T + params["bq"]
    k = drugB @ params["wk"].T + params["bk"]
    v = drugB @ params["wv"].T + params["bv"]
    qh = q.reshape(B, Sa, num_heads, d).transpose(0, 2, 1, 3)
    kh = k.reshape(B, Sb, num_heads, d).transpose(0, 2, 1, 3)
    vh = v.reshape(B, Sb, num_heads, d).transpose(0, 2, 1, 3)
    scores = jnp.einsum("bhqd,bhkd->bhqk", qh, kh) / math.sqrt(d)
    probs = jax.nn.softmax(scores, axis=-1)
    ctx = jnp.einsum("bhqk,bhkd->bhqd", probs, vh)
    ctx = ctx.transpose(0, 2, 1, 3).reshape(B, Sa, H)
    return ctx, probs


if __name__ == "__main__":
    key = jax.random.PRNGKey(0)
    batch, seq_a, seq_b, hidden, num_heads = 2, 8, 8, 32, 4
    ks = jax.random.split(key, 8)

    drugA = jax.random.normal(ks[0], (batch, seq_a, hidden), dtype=jnp.float32)
    drugB = jax.random.normal(ks[1], (batch, seq_b, hidden), dtype=jnp.float32)

    bound = 1.0 / math.sqrt(hidden)
    params = {
        "wq": jax.random.uniform(ks[2], (hidden, hidden), minval=-bound, maxval=bound, dtype=jnp.float32),
        "bq": jax.random.uniform(ks[3], (hidden,), minval=-bound, maxval=bound, dtype=jnp.float32),
        "wk": jax.random.uniform(ks[4], (hidden, hidden), minval=-bound, maxval=bound, dtype=jnp.float32),
        "bk": jax.random.uniform(ks[5], (hidden,), minval=-bound, maxval=bound, dtype=jnp.float32),
        "wv": jax.random.uniform(ks[6], (hidden, hidden), minval=-bound, maxval=bound, dtype=jnp.float32),
        "bv": jax.random.uniform(ks[7], (hidden,), minval=-bound, maxval=bound, dtype=jnp.float32),
    }

    ctx, probs = cross_attention(drugA, drugB, params, num_heads, tm=256)
    ctx, probs = jax.block_until_ready((ctx, probs))

    ref_ctx, ref_probs = _reference(drugA, drugB, params, num_heads)
    assert ctx.shape == (batch, seq_a, hidden)
    assert probs.shape == (batch, num_heads, seq_a, seq_b)
    assert jnp.allclose(ctx, ref_ctx, atol=1e-5, rtol=1e-5), "context mismatch vs reference"
    assert jnp.allclose(probs, ref_probs, atol=1e-5, rtol=1e-5), "attention probs mismatch vs reference"
    print("KERNEL_OK")
</pallas_src>

<mosaic_0001>
module attributes {stable_mosaic.version = 11 : i64} {
  func.func @_dense_kernel(%arg0: i32, %arg1: memref<16x32xf32, #tpu.memory_space<vmem>>, %arg2: memref<32x32xf32, #tpu.memory_space<vmem>>, %arg3: memref<1x32xf32, #tpu.memory_space<vmem>>, %arg4: memref<16x32xf32, #tpu.memory_space<vmem>>) attributes {dimension_semantics = [#tpu.dimension_semantics<parallel>], iteration_bounds = array<i64: 1>, scalar_prefetch = 0 : i64, scratch_operands = 0 : i64, tpu.core_type = #tpu.core_type<tc>, window_params = [{transform_indices = @transform_0, window_bounds = array<i64: 16, 32>}, {pipeline_mode = #tpu.pipeline_mode<synchronous>, transform_indices = @transform_1, window_bounds = array<i64: 32, 32>}, {pipeline_mode = #tpu.pipeline_mode<synchronous>, transform_indices = @transform_2, window_bounds = array<i64: 1, 32>}, {transform_indices = @transform_3, window_bounds = array<i64: 16, 32>}]} {
    %c0 = arith.constant 0 : index
    %c0_0 = arith.constant 0 : index
    %0 = vector.load %arg1[%c0, %c0_0] : memref<16x32xf32, #tpu.memory_space<vmem>>, vector<16x32xf32>
    %c0_1 = arith.constant 0 : index
    %c0_2 = arith.constant 0 : index
    %1 = vector.load %arg2[%c0_1, %c0_2] : memref<32x32xf32, #tpu.memory_space<vmem>>, vector<32x32xf32>
    %cst = arith.constant dense<0.000000e+00> : vector<16x32xf32>
    %2 = tpu.matmul %0, %1, %cst {dimension_numbers = #tpu.dot_dimension_numbers<[1], [0], [0], [1], [0, 0, 1, 1], [], []>} : vector<16x32xf32>, vector<32x32xf32>, vector<16x32xf32> -> vector<16x32xf32>
    %c0_3 = arith.constant 0 : index
    %c0_4 = arith.constant 0 : index
    %3 = vector.load %arg3[%c0_3, %c0_4] : memref<1x32xf32, #tpu.memory_space<vmem>>, vector<1x32xf32>
    %4 = vector.broadcast %3 : vector<1x32xf32> to vector<16x32xf32>
    %5 = arith.addf %2, %4 : vector<16x32xf32>
    %c0_5 = arith.constant 0 : index
    %c0_6 = arith.constant 0 : index
    %6 = vector.load %arg4[%c0_5, %c0_6] : memref<16x32xf32, #tpu.memory_space<vmem>>, vector<16x32xf32>
    tpu.vector_store %arg4[%c0_5, %c0_6], %5 {strides = array<i32>} : memref<16x32xf32, #tpu.memory_space<vmem>>, vector<16x32xf32>,
    return
  }
  func.func @transform_0(%arg0: i32) -> (i32, i32) {
    %c0_i32 = arith.constant 0 : i32
    %c0_i32_0 = arith.constant 0 : i32
    return %arg0, %c0_i32 : i32, i32
  }
  func.func @transform_1(%arg0: i32) -> (i32, i32) {
    %c0_i32 = arith.constant 0 : i32
    %c0_i32_0 = arith.constant 0 : i32
    %c0_i32_1 = arith.constant 0 : i32
    return %c0_i32, %c0_i32_0 : i32, i32
  }
  func.func @transform_2(%arg0: i32) -> (i32, i32) {
    %c0_i32 = arith.constant 0 : i32
    %c0_i32_0 = arith.constant 0 : i32
    %c0_i32_1 = arith.constant 0 : i32
    return %c0_i32, %c0_i32_0 : i32, i32
  }
  func.func @transform_3(%arg0: i32) -> (i32, i32) {
    %c0_i32 = arith.constant 0 : i32
    %c0_i32_0 = arith.constant 0 : i32
    return %arg0, %c0_i32 : i32, i32
  }
}

</mosaic_0001>

<llo_original>
// kernel: tpu_custom_call.1
$region0: #{tpu_custom_call.1}
  #allocation0 [shape = 'u32[]', space=smem, size = 0x4, offset = 0x4, fixed_abs, tag = 'smem constant byte address 0x4 - core index']
  #allocation1 [shape = 'u32[144,128]{1,0:T(1,128)}', space=vmem, size = 0x12000, scoped, tag = 'internal scratch']
  %s0 = inlined_call_operand.hbm [shape: f32[16,32], index: 0, kind: input, shape index: {}]
  %s1 = inlined_call_operand.hbm [shape: f32[32,32], index: 1, kind: input, shape index: {}]
  %s2 = inlined_call_operand.vmem [shape: f32[1,32], index: 2, kind: input, shape index: {}]
  %s3 = inlined_call_operand.hbm [shape: f32[16,32], index: 3, kind: output, shape index: {}]
  %s4 = sld [smem:[#allocation0]]
  $region30: #{tpu_custom_call.1} parent=0
    _
  %s6 = ssub.s32 1, %s4
  %s7 = scalar_select 0, %s6, %s4
  $region1: #{tpu_custom_call.1} parent=0
    #allocation2 [shape = 'u8[8192]{0}', space=vmem, size = 0x2000, scoped, tag = 'input window, operand 0, single buffered']
    #allocation3 [shape = 's32[1]{0}', space=sflag, size = 0x4, scoped, tag = 'scoped memory for tpu_custom_call.1']
    #allocation4 [shape = 's32[1]{0}', space=sflag, size = 0x4, scoped, tag = 'scoped memory for tpu_custom_call.1']
    #allocation5 [shape = 'u8[16384]{0}', space=vmem, size = 0x4000, scoped, tag = 'input window, operand 1, single buffered']
    #allocation6 [shape = 's32[1]{0}', space=sflag, size = 0x4, scoped, tag = 'scoped memory for tpu_custom_call.1']
    #allocation7 [shape = 'u8[8192]{0}', space=vmem, size = 0x2000, scoped, tag = 'output window, operand 0, single buffered']
    %8 = vsyncpa [#allocation3], 0
    %9 = vsyncpa [#allocation6], 0
    %10 = vsyncpa [#allocation4], 0
    // Predicated region
    $region2: #{tpu_custom_call.1} parent=1 // pred_check
      _
    $region3: #{tpu_custom_call.1} parent=1 // pred_check_branch
      %12 = sbr.rel (0) target = $region5
    $region4: #{tpu_custom_call.1} parent=1 // pred_region
      %s14 = ssub.s32 256, 256
      %15 = vsyncadd [#allocation3], %s14
      %s16 = sshll.u32 [#allocation2], 4
      %s17 = int_to_ptr.vmem [resolvable:$true] %s16
      %22 = dma.hbm_to_vmem [thread:$0]  %s0, 256, %s17, [#allocation3], 128, 128, 8
    $region5: #{tpu_custom_call.1} parent=1 // pred_fallthru
      _
    // Predicated region
    $region6: #{tpu_custom_call.1} parent=1 // pred_check
      _
    $region7: #{tpu_custom_call.1} parent=1 // pred_check_branch
      %24 = sbr.rel (0) target = $region9
    $region8: #{tpu_custom_call.1} parent=1 // pred_region
      %s26 = ssub.s32 512, 512
      %27 = vsyncadd [#allocation6], %s26
      %s28 = sshll.u32 [#allocation5], 4
      %s29 = int_to_ptr.vmem [resolvable:$true] %s28
      %34 = dma.hbm_to_vmem [thread:$0]  %s1, 512, %s29, [#allocation6], 128, 128, 8
    $region9: #{tpu_custom_call.1} parent=1 // pred_fallthru
      _
    // Predicated region
    $region10: #{tpu_custom_call.1} parent=1 // pred_check
      _
    $region11: #{tpu_custom_call.1} parent=1 // pred_check_branch
      %36 = sbr.rel (0) target = $region13
    $region12: #{tpu_custom_call.1} parent=1 // pred_region
      _
    $region13: #{tpu_custom_call.1} parent=1 // pred_fallthru
      _
    // Predicated region
    $region14: #{tpu_custom_call.1} parent=1 // pred_check
      _
    $region15: #{tpu_custom_call.1} parent=1 // pred_check_branch
      %38 = sbr.rel (0) target = $region17
    $region16: #{tpu_custom_call.1} parent=1 // pred_region
      %39 = dma.done [#allocation3], 256
    $region17: #{tpu_custom_call.1} parent=1 // pred_fallthru
      _
    // Predicated region
    $region18: #{tpu_custom_call.1} parent=1 // pred_check
      _
    $region19: #{tpu_custom_call.1} parent=1 // pred_check_branch
      %41 = sbr.rel (0) target = $region21
    $region20: #{tpu_custom_call.1} parent=1 // pred_region
      %42 = dma.done [#allocation6], 512
    $region21: #{tpu_custom_call.1} parent=1 // pred_fallthru
      _
    %v43 = vld [vmem:[#allocation2] sm:$0xff]
    %v44 = vld [vmem:[#allocation2 + $0x8] sm:$0xff]
    %v45 = vld [vmem:[#allocation5] sm:$0xff]
    %v46 = vld [vmem:[#allocation5 + $0x8] sm:$0xff]
    %v47 = vld [vmem:[#allocation5 + $0x10] sm:$0xff]
    %v48 = vld [vmem:[#allocation5 + $0x18] sm:$0xff]
    %v49 = vld [vmem:[%s2] sm:$0x1]
    %v51 = vlaneseq
    %v52 = vshrl.u32 %v51, 7
    %v53 = vsub.s32 0, %v52
    %v54 = vrot.slane %v49, %v53
    %vm56 = vcmask 261120
    %v58 = vsel %vm56, %v43, 0
    %v61 = vsel %vm56, %v44, 0
    %63 = vmatprep.subr.mxu0 0.0
    %64 = vmatpush1.msra.mxu0 %v45
    %65 = vmatprep.subr.mxu0 0.0
    %66 = vmatpush1.msra.mxu0 %v46
    %67 = vmatprep.subr.mxu0 0.0
    %68 = vmatpush1.msra.mxu0 %v47
    %69 = vmatprep.subr.mxu0 0.0
    %70 = vmatpush1.msra.mxu0 %v48
    %71 = vmatprep.subr.mxu0 0.0
    %72 = vmatpush1.msra.mxu0 0.0
    %73 = vmatprep.subr.mxu0 0.0
    %74 = vmatpush1.msra.mxu0 0.0
    %75 = vmatprep.subr.mxu0 0.0
    %76 = vmatpush1.msra.mxu0 0.0
    %77 = vmatprep.subr.mxu0 0.0
    %78 = vmatpush1.msra.mxu0 0.0
    %79 = vmatprep.subr.mxu0 0.0
    %80 = vmatpush1.msra.mxu0 0.0
    %81 = vmatprep.subr.mxu0 0.0
    %82 = vmatpush1.msra.mxu0 0.0
    %83 = vmatprep.subr.mxu0 0.0
    %84 = vmatpush1.msra.mxu0 0.0
    %85 = vmatprep.subr.mxu0 0.0
    %86 = vmatpush1.msra.mxu0 0.0
    %87 = vmatprep.subr.mxu0 0.0
    %88 = vmatpush1.msra.mxu0 0.0
    %89 = vmatprep.subr.mxu0 0.0
    %90 = vmatpush1.msra.mxu0 0.0
    %91 = vmatprep.subr.mxu0 0.0
    %92 = vmatpush1.msra.mxu0 0.0
    %93 = vmatprep.subr.mxu0 0.0
    %94 = vmatpush1.msra.mxu0 0.0
    %95 = vmatprep.subr.mxu0 0.0
    %96 = vmatpush1.msra.mxu0 0.0
    %97 = vmatprep.subr.mxu0 0.0
    %98 = vmatpush1.msra.mxu0 0.0
    %99 = vmatprep.subr.mxu0 0.0
    %100 = vmatpush1.msra.mxu0 0.0
    %101 = vmatprep.subr.mxu0 0.0
    %102 = vmatpush1.msra.mxu0 0.0
    %103 = vmatprep.subr.mxu0 0.0
    %104 = vmatpush1.msra.mxu0 0.0
    %105 = vmatprep.subr.mxu0 0.0
    %106 = vmatpush1.msra.mxu0 0.0
    %107 = vmatprep.subr.mxu0 0.0
    %108 = vmatpush1.msra.mxu0 0.0
    %109 = vmatprep.subr.mxu0 0.0
    %110 = vmatpush1.msra.mxu0 0.0
    %111 = vmatprep.subr.mxu0 0.0
    %112 = vmatpush1.msra.mxu0 0.0
    %113 = vmatprep.subr.mxu0 0.0
    %114 = vmatpush1.msra.mxu0 0.0
    %115 = vmatprep.subr.mxu0 0.0
    %116 = vmatpush1.msra.mxu0 0.0
    %117 = vmatprep.subr.mxu0 0.0
    %118 = vmatpush1.msra.mxu0 0.0
    %119 = vmatprep.subr.mxu0 0.0
    %120 = vmatpush1.msra.mxu0 0.0
    %121 = vmatprep.subr.mxu0 0.0
    %122 = vmatpush1.msra.mxu0 0.0
    %123 = vmatprep.subr.mxu0 0.0
    %124 = vmatpush1.msra.mxu0 0.0
    %125 = vmatprep.subr.mxu0 0.0
    %126 = vmatpush1.msra.mxu0 0.0
    %127 = vmatprep.mubr.f32.mxu0 0.0
    %128 = vmatmul.mubr.f32.gmra.mrb[0].mxu0 %v58
    %v129 = vpop.f32.mrb[0].mxu0
    %v130 = vadd.f32 %v54, %v129
    %v131 = vpop.f32.mrb[0].mxu0
    %132 = vmatprep.mubr.f32.mxu0 0.0
    %133 = vmatmul.mubr.f32.gmra.mrb[0].mxu0 %v61
    %v134 = vpop.f32.mrb[0].mxu0
    %v135 = vadd.f32 %v54, %v134
    %v136 = vpop.f32.mrb[0].mxu0
    %137 = vdwg.mxu0
    %138 = vst.msk [vmem:[#allocation7] sm:$0xff] %vm56, %v130
    %139 = vst.msk [vmem:[#allocation7 + $0x8] sm:$0xff] %vm56, %v135
    // Predicated region
    $region22: #{tpu_custom_call.1} parent=1 // pred_check
      _
    $region23: #{tpu_custom_call.1} parent=1 // pred_check_branch
      %141 = sbr.rel (0) target = $region25
    $region24: #{tpu_custom_call.1} parent=1 // pred_region
      %s143 = ssub.s32 256, 256
      %144 = vsyncadd [#allocation4], %s143
      %s145 = sshll.u32 [#allocation7], 4
      %s146 = int_to_ptr.vmem [resolvable:$true] %s145
      %151 = dma.vmem_to_hbm [thread:$0]  %s146, 256, %s3, [#allocation4], 128, 128, 8
    $region25: #{tpu_custom_call.1} parent=1 // pred_fallthru
      _
    // Predicated region
    $region26: #{tpu_custom_call.1} parent=1 // pred_check
      _
    $region27: #{tpu_custom_call.1} parent=1 // pred_check_branch
      %153 = sbr.rel (0) target = $region29
    $region28: #{tpu_custom_call.1} parent=1 // pred_region
      %154 = dma.done [#allocation4], 256
    $region29: #{tpu_custom_call.1} parent=1 // pred_fallthru
      _
    %155 = vsyncpa [#allocation3], 1
    %156 = vsyncpa [#allocation6], 1
    %157 = vsyncpa [#allocation4], 1

</llo_original>
